<compile_context>
chip_gen: v7x
topology: tpu7x:2x2x1
jax: 0.10.0
libtpu: 0.0.40
codegen_flags: <defaults>
</compile_context>

<pallas_src>
import functools

import jax
import jax.numpy as jnp
from jax import lax
from jax.experimental import pallas as pl
from jax.experimental.pallas import tpu as pltpu

HIDDEN = 512                        # fixed by nn.Linear(512, num_cls)
LANE = 128                          # TPU lane width
DEFAULT_BATCH_TILE = 2048           # 4 MiB f32 x tile; sweepable 2048-4096
CLASS_TILE = 256                    # class-axis tile for large num_cls
VMEM_CAP_BYTES = 48 * 1024 * 1024   # conservative scoped cap (fits v7x 64 MiB)


def _round_up(n, m):
    return ((n + m - 1) // m) * m


def _classifier_kernel(x_ref, w_ref, b_ref, o_ref, *, apply_sigmoid: bool,
                       compute_dtype):
    x = x_ref[...]                                  # (TB, H), caller dtype
    if x.dtype != compute_dtype:
        x = x.astype(compute_dtype)
    # Weight/bias were materialized in their final dtype by the wrapper, so
    # there is no per-tile cast (saves VPU work + vreg pressure).
    out = jnp.dot(x, w_ref[...], preferred_element_type=jnp.float32)  # MXU
    out = out + b_ref[...]                          # (1, TNw) broadcasts
    if apply_sigmoid:
        out = jax.nn.sigmoid(out)                   # EUP
    # The weight block may be lane-padded wider than the real output block
    # (small num_cls); keep only the real class columns for the store so the
    # HBM writeback is unpadded.
    tc = o_ref.shape[1]
    if tc != out.shape[1]:
        out = out[:, :tc]
    o_ref[...] = out.astype(o_ref.dtype)


def classifier_forward(x, weight, bias, *, norm_flag: bool,
                       batch_tile: int = DEFAULT_BATCH_TILE,
                       compute_dtype=jnp.float32,
                       out_dtype=jnp.float32):
    """x: (B, 512), weight: (num_cls, 512) (PyTorch nn.Linear layout),
    bias: (num_cls,).  Returns (B, num_cls) in out_dtype."""
    B, H = x.shape
    assert H == HIDDEN
    C = weight.shape[0]
    compute_dtype = jnp.dtype(compute_dtype)

    # ---- One-shot weight/bias prep (plain JAX; XLA fuses transpose + norm +
    # ---- pad + cast into one tiny pass -- runs once, not per batch tile). ---
    w = weight.astype(jnp.float32)
    if norm_flag:
        # l2_norm(weight, axis=0): per-feature norm across classes, keepdim.
        # No epsilon, to match torch.div(input, torch.norm(...)) exactly.
        w = w / jnp.sqrt(jnp.sum(w * w, axis=0, keepdims=True))

    # Class-axis tiling: one lane-padded tile for small C (weight stays VMEM
    # resident with a constant block index -> DMA'd once); 256-wide tiles for
    # large C so resident buffers do not scale with num_cls (v7x 64 MiB VMEM).
    if C > 2 * CLASS_TILE:
        TN_w = CLASS_TILE
    else:
        TN_w = _round_up(C, LANE)
    Cpad = _round_up(C, TN_w)
    n_ct = Cpad // TN_w
    TN_out = C if n_ct == 1 else TN_w

    w_t = jnp.pad(w.T, ((0, 0), (0, Cpad - C))).astype(compute_dtype)   # (H, Cpad)
    b_row = jnp.pad(bias.astype(jnp.float32).reshape(1, C),
                    ((0, 0), (0, Cpad - C)))                            # (1, Cpad)

    # ---- Batch tiling -------------------------------------------------------
    if B > batch_tile:
        TB = max(8, (batch_tile // 8) * 8)
    else:
        TB = B                                      # full extent (always legal)

    x_bytes = jnp.dtype(x.dtype).itemsize
    w_bytes = compute_dtype.itemsize
    o_bytes = jnp.dtype(out_dtype).itemsize

    def _vmem_need(tb):
        # Double-buffered x / out tiles + weight/bias tiles + f32 matmul value.
        return (2 * tb * H * x_bytes
                + 2 * tb * TN_out * o_bytes
                + 2 * H * TN_w * w_bytes
                + 2 * TN_w * 4
                + tb * TN_w * 4)

    while TB > 512 and _vmem_need(TB) > VMEM_CAP_BYTES - (8 << 20):
        TB = max(512, ((TB // 2) // 8) * 8)
    vmem_limit = int(min(max(_vmem_need(TB) + (8 << 20), 32 << 20),
                         VMEM_CAP_BYTES))

    grid = (pl.cdiv(B, TB), n_ct)

    kernel = functools.partial(
        _classifier_kernel,
        apply_sigmoid=(C == 1),
        compute_dtype=compute_dtype,
    )

    # TODO(synk): once pl.Buffered(1) is verified on the installed jax, mark
    # the constant-index weight/bias specs single-buffered to halve their
    # (small) resident VMEM footprint.
    out = pl.pallas_call(
        kernel,
        out_shape=jax.ShapeDtypeStruct((B, C), out_dtype),
        grid=grid,
        in_specs=[
            pl.BlockSpec((TB, H), lambda i, j: (i, 0)),      # x: batch-tiled
            pl.BlockSpec((H, TN_w), lambda i, j: (0, j)),    # W: class-tiled/resident
            pl.BlockSpec((1, TN_w), lambda i, j: (0, j)),    # b
        ],
        out_specs=pl.BlockSpec((TB, TN_out), lambda i, j: (i, j)),
        compiler_params=pltpu.CompilerParams(
            dimension_semantics=("parallel", "parallel"),    # megacore-friendly
            vmem_limit_bytes=vmem_limit,
        ),
    )(x, w_t, b_row)

    return out


def _reference(x, weight, bias, *, norm_flag: bool):
    w = weight
    if norm_flag:
        w = w / jnp.sqrt(jnp.sum(w * w, axis=0, keepdims=True))
    out = jnp.dot(x, w.T, precision=lax.Precision.HIGHEST) + bias
    if weight.shape[0] == 1:
        out = jax.nn.sigmoid(out)
    return out


def _init_params(key, num_cls):
    # Module __init__ uses weight ~ N(0, 0.01) and bias = 0; we use a small
    # nonzero bias here purely so the bias-add path is actually exercised.
    kw, kb = jax.random.split(key)
    w = 0.01 * jax.random.normal(kw, (num_cls, HIDDEN), dtype=jnp.float32)
    b = 0.1 * jax.random.normal(kb, (num_cls,), dtype=jnp.float32)
    return w, b


if __name__ == "__main__":
    key = jax.random.PRNGKey(0)
    k_x, k_p = jax.random.split(key)

    # (batch, num_cls, batch_tile) configs.  batch_tile=8 exercises the tiled,
    # pipelined batch grid (including a partial final batch block for B=20);
    # the default batch_tile exercises the single-block full-extent path;
    # num_cls=600 exercises the class-tiled path (3 class tiles of 256, with a
    # partial final output block).
    configs = [
        (16, 8, 8), (20, 8, 8), (16, 1, 8), (20, 1, 8),
        (16, 8, DEFAULT_BATCH_TILE), (20, 1, DEFAULT_BATCH_TILE),
        (16, 600, DEFAULT_BATCH_TILE),
    ]

    ok = True
    for batch, num_cls, bt in configs:
        x = jax.random.normal(jax.random.fold_in(k_x, batch),
                              (batch, HIDDEN), dtype=jnp.float32)
        w, b = _init_params(jax.random.fold_in(k_p, num_cls), num_cls)
        for norm_flag in (True, False):
            out = jax.block_until_ready(
                classifier_forward(x, w, b, norm_flag=norm_flag,
                                   batch_tile=bt))
            ref = _reference(x, w, b, norm_flag=norm_flag)
            ok &= out.shape == (batch, num_cls)
            ok &= bool(jnp.allclose(out, ref, atol=1e-4, rtol=1e-4))

    print("KERNEL_OK" if ok else "KERNEL_MISMATCH")
</pallas_src>

<mosaic_0001>
module attributes {stable_mosaic.version = 11 : i64} {
  func.func @_classifier_kernel(%arg0: i32, %arg1: i32, %arg2: memref<8x512xf32, #tpu.memory_space<vmem>>, %arg3: memref<512x128xf32, #tpu.memory_space<vmem>>, %arg4: memref<1x128xf32, #tpu.memory_space<vmem>>, %arg5: memref<8x8xf32, #tpu.memory_space<vmem>>) attributes {dimension_semantics = [#tpu.dimension_semantics<parallel>, #tpu.dimension_semantics<parallel>], iteration_bounds = array<i64: 2, 1>, scalar_prefetch = 0 : i64, scratch_operands = 0 : i64, tpu.core_type = #tpu.core_type<tc>, window_params = [{transform_indices = @transform_0, window_bounds = array<i64: 8, 512>}, {transform_indices = @transform_1, window_bounds = array<i64: 512, 128>}, {transform_indices = @transform_2, window_bounds = array<i64: 1, 128>}, {transform_indices = @transform_3, window_bounds = array<i64: 8, 8>}]} {
    %c0 = arith.constant 0 : index
    %c0_0 = arith.constant 0 : index
    %0 = vector.load %arg2[%c0, %c0_0] : memref<8x512xf32, #tpu.memory_space<vmem>>, vector<8x512xf32>
    %c0_1 = arith.constant 0 : index
    %c0_2 = arith.constant 0 : index
    %1 = vector.load %arg3[%c0_1, %c0_2] : memref<512x128xf32, #tpu.memory_space<vmem>>, vector<512x128xf32>
    %cst = arith.constant dense<0.000000e+00> : vector<8x128xf32>
    %2 = tpu.matmul %0, %1, %cst {dimension_numbers = #tpu.dot_dimension_numbers<[1], [0], [0], [1], [0, 0, 1, 1], [], []>} : vector<8x512xf32>, vector<512x128xf32>, vector<8x128xf32> -> vector<8x128xf32>
    %c0_3 = arith.constant 0 : index
    %c0_4 = arith.constant 0 : index
    %3 = vector.load %arg4[%c0_3, %c0_4] : memref<1x128xf32, #tpu.memory_space<vmem>>, vector<1x128xf32>
    %4 = vector.broadcast %3 : vector<1x128xf32> to vector<8x128xf32>
    %5 = arith.addf %2, %4 : vector<8x128xf32>
    %6 = vector.extract_strided_slice %5 {offsets = [0, 0], sizes = [8, 8], strides = [1, 1]} : vector<8x128xf32> to vector<8x8xf32>
    %c0_5 = arith.constant 0 : index
    %c0_6 = arith.constant 0 : index
    %7 = vector.load %arg5[%c0_5, %c0_6] : memref<8x8xf32, #tpu.memory_space<vmem>>, vector<8x8xf32>
    tpu.vector_store %arg5[%c0_5, %c0_6], %6 {strides = array<i32>} : memref<8x8xf32, #tpu.memory_space<vmem>>, vector<8x8xf32>,
    return
  }
  func.func @transform_0(%arg0: i32, %arg1: i32) -> (i32, i32) {
    %c0_i32 = arith.constant 0 : i32
    %c0_i32_0 = arith.constant 0 : i32
    return %arg0, %c0_i32 : i32, i32
  }
  func.func @transform_1(%arg0: i32, %arg1: i32) -> (i32, i32) {
    %c0_i32 = arith.constant 0 : i32
    %c0_i32_0 = arith.constant 0 : i32
    return %c0_i32, %arg1 : i32, i32
  }
  func.func @transform_2(%arg0: i32, %arg1: i32) -> (i32, i32) {
    %c0_i32 = arith.constant 0 : i32
    %c0_i32_0 = arith.constant 0 : i32
    return %c0_i32, %arg1 : i32, i32
  }
  func.func @transform_3(%arg0: i32, %arg1: i32) -> (i32, i32) {
    %c0_i32 = arith.constant 0 : i32
    return %arg0, %arg1 : i32, i32
  }
}

</mosaic_0001>

<llo_original>
// kernel: tpu_custom_call.1
$region0: #{tpu_custom_call.1}
  #allocation0 [shape = 'u32[]', space=smem, size = 0x4, offset = 0x4, fixed_abs, tag = 'smem constant byte address 0x4 - core index']
  #allocation1 [shape = 'u32[144,128]{1,0:T(1,128)}', space=vmem, size = 0x12000, scoped, tag = 'internal scratch']
  %s0 = inlined_call_operand.hbm [shape: f32[16,512], index: 0, kind: input, shape index: {}]
  %s1 = inlined_call_operand.hbm [shape: f32[512,128], index: 1, kind: input, shape index: {}]
  %s2 = inlined_call_operand.vmem [shape: f32[1,128], index: 2, kind: input, shape index: {}]
  %s3 = inlined_call_operand.vmem [shape: f32[16,8], index: 3, kind: output, shape index: {}]
  %s4 = sld [smem:[#allocation0]]
  $region53: #{tpu_custom_call.1} parent=0
    _
  %s6 = ssub.s32 1, %s4
  %s7 = scalar_select 0, %s6, %s4
  $region1: #{tpu_custom_call.1} parent=0
    #allocation2 [shape = 'u8[32768]{0}', space=vmem, size = 0x8000, scoped, tag = 'input window, operand 0']
    #allocation3 [shape = 's32[2]{0}', space=sflag, size = 0x8, scoped, tag = 'scoped memory for tpu_custom_call.1']
    #allocation4 [shape = 'u8[262144]{0}', space=vmem, size = 0x40000, scoped, tag = 'input window, operand 1, single buffered']
    #allocation5 [shape = 's32[1]{0}', space=sflag, size = 0x4, scoped, tag = 'scoped memory for tpu_custom_call.1']
    %8 = vsyncpa [#allocation3], 0
    %s9 = scalar_lea.sflag [#allocation3], 1
    %10 = vsyncpa %s9, 0
    %11 = vsyncpa [#allocation5], 0
    loop: start=0, step=1, limit=4
    $region2: #{tpu_custom_call.1} parent=1 // loop_pre_header
      _
    $region3: #{tpu_custom_call.1} parent=1 // loop_header
      %s13 = sphi 0, %s17
      %p14 = scmp.ge.s32.totalorder %s13, 4
      %s20 = sphi 0, %s32
      %s21 = sphi 0, %s28
      %s22 = sphi 0, %s20
      %s23 = sphi 0, %s21
      %s24 = sphi 0, %s22
      %s25 = sphi 0, %s23
      %s35 = sphi 0, %s37
      %s38 = sphi 0, %s35
      %s39 = sphi 0, %s38
      %s55 = sphi 0, %s39
      %s61 = sphi 0, %s63
      %s64 = sphi 0, %s61
      %s65 = sphi 0, %s64
      %s81 = sphi 0, %s65
      %s87 = sphi 0, %s89
      %s90 = sphi 0, %s87
      %s91 = sphi 0, %s90
      %s107 = sphi 0, %s91
      %s115 = sphi 0, %s117
      %s118 = sphi 0, %s115
      %s119 = sphi 0, %s118
      %s135 = sphi 0, %s119
    $region4: #{tpu_custom_call.1} parent=1 // loop_header_branch
      %16 = sbr.rel (%p14) target = $region8
    $region5: #{tpu_custom_call.1} parent=1 // loop_body
      %s18 = ssub.s32 %s13, 1
      %s19 = ssub.s32 %s13, 2
      %s26 = sadd.s32 1, %s21
      %p27 = scmp.ge.s32.totalorder %s26, 1
      %s28 = scalar_select %p27, 0, %s26
      %s29 = sadd.s32 1, %s20
      %s30 = scalar_select %p27, %s29, %s20
      %p31 = scmp.ge.s32.totalorder %s30, 2
      %s32 = scalar_select %p31, 0, %s30
      %s33 = ssub.s32 %s20, %s32
      %p34 = scmp.eq.s32.totalorder %s33, 0
      %s36 = sadd.s32 %s35, 1
      %s37 = scalar_select %p34, %s35, %s36
      %p40 = pneg %p34
      %p41 = scmp.eq.s32.totalorder %s13, 1
      %p42 = por %p40, %p41
      %p43 = scmp.ne.s32.totalorder %s35, %s38
      %p44 = scmp.eq.s32.totalorder %s13, 0
      %p45 = por %p43, %p44
      %p46 = scmp.ne.s32.totalorder %s35, %s38
      %p47 = scmp.eq.s32.totalorder %s18, 1
      %p48 = por %p46, %p47
      %p49 = scmp.ne.s32.totalorder %s38, %s39
      %p50 = scmp.eq.s32.totalorder %s18, 0
      %p51 = por %p49, %p50
      %p52 = scmp.ne.s32.totalorder %s38, %s39
      %p53 = scmp.eq.s32.totalorder %s19, 1
      %p54 = por %p52, %p53
      %p56 = scmp.ne.s32.totalorder %s39, %s55
      %p57 = scmp.eq.s32.totalorder %s19, 0
      %p58 = por %p56, %p57
      %s59 = ssub.s32 %s21, %s28
      %p60 = scmp.eq.s32.totalorder %s59, 0
      %s62 = sadd.s32 %s61, 1
      %s63 = scalar_select %p60, %s61, %s62
      %p66 = pneg %p60
      %p67 = scmp.eq.s32.totalorder %s13, 1
      %p68 = por %p66, %p67
      %p69 = scmp.ne.s32.totalorder %s61, %s64
      %p70 = scmp.eq.s32.totalorder %s13, 0
      %p71 = por %p69, %p70
      %p72 = scmp.ne.s32.totalorder %s61, %s64
      %p73 = scmp.eq.s32.totalorder %s18, 1
      %p74 = por %p72, %p73
      %p75 = scmp.ne.s32.totalorder %s64, %s65
      %p76 = scmp.eq.s32.totalorder %s18, 0
      %p77 = por %p75, %p76
      %p78 = scmp.ne.s32.totalorder %s64, %s65
      %p79 = scmp.eq.s32.totalorder %s19, 1
      %p80 = por %p78, %p79
      %p82 = scmp.ne.s32.totalorder %s65, %s81
      %p83 = scmp.eq.s32.totalorder %s19, 0
      %p84 = por %p82, %p83
      %s85 = ssub.s32 %s21, %s28
      %p86 = scmp.eq.s32.totalorder %s85, 0
      %s88 = sadd.s32 %s87, 1
      %s89 = scalar_select %p86, %s87, %s88
      %p92 = pneg %p86
      %p93 = scmp.eq.s32.totalorder %s13, 1
      %p94 = por %p92, %p93
      %p95 = scmp.ne.s32.totalorder %s87, %s90
      %p96 = scmp.eq.s32.totalorder %s13, 0
      %p97 = por %p95, %p96
      %p98 = scmp.ne.s32.totalorder %s87, %s90
      %p99 = scmp.eq.s32.totalorder %s18, 1
      %p100 = por %p98, %p99
      %p101 = scmp.ne.s32.totalorder %s90, %s91
      %p102 = scmp.eq.s32.totalorder %s18, 0
      %p103 = por %p101, %p102
      %p104 = scmp.ne.s32.totalorder %s90, %s91
      %p105 = scmp.eq.s32.totalorder %s19, 1
      %p106 = por %p104, %p105
      %p108 = scmp.ne.s32.totalorder %s91, %s107
      %p109 = scmp.eq.s32.totalorder %s19, 0
      %p110 = por %p108, %p109
      %s111 = ssub.s32 %s20, %s32
      %s112 = ssub.s32 %s21, %s28
      %s113 = sor.u32 %s111, %s112
      %p114 = scmp.eq.s32.totalorder %s113, 0
      %s116 = sadd.s32 %s115, 1
      %s117 = scalar_select %p114, %s115, %s116
      %p120 = pneg %p114
      %p121 = scmp.eq.s32.totalorder %s13, 1
      %p122 = por %p120, %p121
      %p123 = scmp.ne.s32.totalorder %s115, %s118
      %p124 = scmp.eq.s32.totalorder %s13, 0
      %p125 = por %p123, %p124
      %p126 = scmp.ne.s32.totalorder %s115, %s118
      %p127 = scmp.eq.s32.totalorder %s18, 1
      %p128 = por %p126, %p127
      %p129 = scmp.ne.s32.totalorder %s118, %s119
      %p130 = scmp.eq.s32.totalorder %s18, 0
      %p131 = por %p129, %p130
      %p132 = scmp.ne.s32.totalorder %s118, %s119
      %p133 = scmp.eq.s32.totalorder %s19, 1
      %p134 = por %p132, %p133
      %p136 = scmp.ne.s32.totalorder %s119, %s135
      %p137 = scmp.eq.s32.totalorder %s19, 0
      %p138 = por %p136, %p137
      %p139 = scmp.le.s32.totalorder 1, %s13
      %p140 = scmp.lt.s32.totalorder %s13, 3
      %p141 = pnand %p139, %p140
      %p142 = pneg %p141
      // Predicated region
      $region9: #{tpu_custom_call.1} parent=5 // pred_check
        _
      $region10: #{tpu_custom_call.1} parent=5 // pred_check_branch
        %144 = sbr.rel (%p141) target = $region12
      $region11: #{tpu_custom_call.1} parent=5 // pred_region
        %s145 = ssub.s32 %s13, 1
        // Predicated region
        $region13: #{tpu_custom_call.1} parent=11 // pred_check
          %p146 = pneg %p77
        $region14: #{tpu_custom_call.1} parent=11 // pred_check_branch
          %148 = sbr.rel (%p146) target = $region16
        $region15: #{tpu_custom_call.1} parent=11 // pred_region
          %s150 = ssub.s32 8192, 8192
          %151 = vsyncadd [#allocation5], %s150
          %s152 = smul.addr %s23, 128
          %s153 = scalar_lea.hbm %s1, %s152
          %s154 = sshll.u32 [#allocation4], 4
          %s155 = int_to_ptr.vmem [resolvable:$true] %s154
          %160 = dma.hbm_to_vmem [thread:$0]  %s153, 8192, %s155, [#allocation5], 128, 128, 8
        $region16: #{tpu_custom_call.1} parent=11 // pred_fallthru
          _
        // Predicated region
        $region17: #{tpu_custom_call.1} parent=11 // pred_check
          %p161 = pneg %p103
        $region18: #{tpu_custom_call.1} parent=11 // pred_check_branch
          %163 = sbr.rel (%p161) target = $region20
        $region19: #{tpu_custom_call.1} parent=11 // pred_region
          %p164 = scmp.lt.s32.totalorder %s23, 0
          %s165 = scalar_select %p164, %s23, 0
          %s166 = scalar_lea.vmem %s2, %s165
        $region20: #{tpu_custom_call.1} parent=11 // pred_fallthru
          _
      $region12: #{tpu_custom_call.1} parent=5 // pred_fallthru
        _
      %p167 = scmp.lt.s32.totalorder %s13, 2
      // Predicated region
      $region21: #{tpu_custom_call.1} parent=5 // pred_check
        %p168 = pneg %p167
      $region22: #{tpu_custom_call.1} parent=5 // pred_check_branch
        %170 = sbr.rel (%p168) target = $region24
      $region23: #{tpu_custom_call.1} parent=5 // pred_region
        // Predicated region
        $region25: #{tpu_custom_call.1} parent=23 // pred_check
          %p171 = pneg %p45
        $region26: #{tpu_custom_call.1} parent=23 // pred_check_branch
          %173 = sbr.rel (%p171) target = $region28
        $region27: #{tpu_custom_call.1} parent=23 // pred_region
          %s174 = sand.u32 %s35, 1
          %s175 = scalar_lea.sflag [#allocation3], %s174
          %s176 = sand.u32 %s35, 1
          %s177 = smul.addr %s176, 32
          %s178 = scalar_lea.vmem [#allocation2], %s177
          %s180 = ssub.s32 512, 512
          %181 = vsyncadd %s175, %s180
          %s182 = smul.addr %s20, 4
          %s183 = smul.addr %s182, 128
          %s184 = scalar_lea.hbm %s0, %s183
          %s186 = sshll.u32 %s178, 4
          %s187 = int_to_ptr.vmem [resolvable:$true] %s186
          %189 = dma.hbm_to_vmem [thread:$0]  %s184, 512, %s187, %s175
        $region28: #{tpu_custom_call.1} parent=23 // pred_fallthru
          _
      $region24: #{tpu_custom_call.1} parent=5 // pred_fallthru
        _
      %p190 = scmp.le.s32.totalorder 1, %s13
      %p191 = scmp.lt.s32.totalorder %s13, 3
      %p192 = pnand %p190, %p191
      %p193 = pneg %p192
      // Predicated region
      $region29: #{tpu_custom_call.1} parent=5 // pred_check
        _
      $region30: #{tpu_custom_call.1} parent=5 // pred_check_branch
        %195 = sbr.rel (%p192) target = $region32
      $region31: #{tpu_custom_call.1} parent=5 // pred_region
        %s196 = ssub.s32 %s13, 1
        %s197 = sand.u32 %s38, 1
        %s198 = scalar_lea.sflag [#allocation3], %s197
        %s199 = sand.u32 %s38, 1
        %s200 = smul.addr %s199, 32
        %s201 = scalar_lea.vmem [#allocation2], %s200
        // Predicated region
        $region33: #{tpu_custom_call.1} parent=31 // pred_check
          %p202 = pneg %p51
        $region34: #{tpu_custom_call.1} parent=31 // pred_check_branch
          %204 = sbr.rel (%p202) target = $region36
        $region35: #{tpu_custom_call.1} parent=31 // pred_region
          %205 = dma.done %s198, 512
        $region36: #{tpu_custom_call.1} parent=31 // pred_fallthru
          _
        // Predicated region
        $region37: #{tpu_custom_call.1} parent=31 // pred_check
          %p206 = pneg %p77
        $region38: #{tpu_custom_call.1} parent=31 // pred_check_branch
          %208 = sbr.rel (%p206) target = $region40
        $region39: #{tpu_custom_call.1} parent=31 // pred_region
          %209 = dma.done [#allocation5], 8192
        $region40: #{tpu_custom_call.1} parent=31 // pred_fallthru
          _
        %s210 = sand.u32 %s38, 1
        %s211 = scalar_lea.sflag [#allocation3], %s210
        %s212 = sand.u32 %s38, 1
        %s213 = smul.addr %s212, 32
        %s214 = scalar_lea.vmem [#allocation2], %s213
        %p215 = pneg %p51
        %p216 = pneg %p48
        %p217 = pneg %p77
        %p218 = pneg %p74
        %p219 = scmp.lt.s32.totalorder %s23, 0
        %s220 = scalar_select %p219, %s23, 0
        %s221 = scalar_lea.vmem %s2, %s220
        %p222 = pneg %p103
        %p223 = pneg %p100
        %p224 = pneg %p131
        %p225 = pneg %p128
        %p226 = scmp.lt.s32.totalorder %s22, 1
        %s227 = scalar_select %p226, %s22, 1
        %p228 = scmp.lt.s32.totalorder %s23, 0
        %s229 = scalar_select %p228, %s23, 0
        %s230 = sadd.s32 %s229, %s227
        %s231 = smul.addr %s230, 8
        %s232 = scalar_lea.vmem %s3, %s231
        %p233 = scmp.lt.s32.totalorder %s23, 0
        %s234 = scalar_select %p233, %s23, 0
        %s235 = scalar_lea.vmem %s2, %s234
        %p236 = scmp.lt.s32.totalorder %s22, 1
        %s237 = scalar_select %p236, %s22, 1
        %p238 = scmp.lt.s32.totalorder %s23, 0
        %s239 = scalar_select %p238, %s23, 0
        %s240 = sadd.s32 %s239, %s237
        %s241 = smul.addr %s240, 8
        %s242 = scalar_lea.vmem %s3, %s241
        %v243 = vld [vmem:[%s201] sm:$0xff]
        %v244 = vld [vmem:[%s201 + $0x8] sm:$0xff]
        %v245 = vld [vmem:[%s201 + $0x10] sm:$0xff]
        %v246 = vld [vmem:[%s201 + $0x18] sm:$0xff]
        %v247 = vld [vmem:[#allocation4] sm:$0xff]
        %v248 = vld [vmem:[#allocation4 + $0x8] sm:$0xff]
        %v249 = vld [vmem:[#allocation4 + $0x10] sm:$0xff]
        %v250 = vld [vmem:[#allocation4 + $0x18] sm:$0xff]
        %v251 = vld [vmem:[#allocation4 + $0x20] sm:$0xff]
        %v252 = vld [vmem:[#allocation4 + $0x28] sm:$0xff]
        %v253 = vld [vmem:[#allocation4 + $0x30] sm:$0xff]
        %v254 = vld [vmem:[#allocation4 + $0x38] sm:$0xff]
        %v255 = vld [vmem:[#allocation4 + $0x40] sm:$0xff]
        %v256 = vld [vmem:[#allocation4 + $0x48] sm:$0xff]
        %v257 = vld [vmem:[#allocation4 + $0x50] sm:$0xff]
        %v258 = vld [vmem:[#allocation4 + $0x58] sm:$0xff]
        %v259 = vld [vmem:[#allocation4 + $0x60] sm:$0xff]
        %v260 = vld [vmem:[#allocation4 + $0x68] sm:$0xff]
        %v261 = vld [vmem:[#allocation4 + $0x70] sm:$0xff]
        %v262 = vld [vmem:[#allocation4 + $0x78] sm:$0xff]
        %v263 = vld [vmem:[#allocation4 + $0x80] sm:$0xff]
        %v264 = vld [vmem:[#allocation4 + $0x88] sm:$0xff]
        %v265 = vld [vmem:[#allocation4 + $0x90] sm:$0xff]
        %v266 = vld [vmem:[#allocation4 + $0x98] sm:$0xff]
        %v267 = vld [vmem:[#allocation4 + $0xa0] sm:$0xff]
        %v268 = vld [vmem:[#allocation4 + $0xa8] sm:$0xff]
        %v269 = vld [vmem:[#allocation4 + $0xb0] sm:$0xff]
        %v270 = vld [vmem:[#allocation4 + $0xb8] sm:$0xff]
        %v271 = vld [vmem:[#allocation4 + $0xc0] sm:$0xff]
        %v272 = vld [vmem:[#allocation4 + $0xc8] sm:$0xff]
        %v273 = vld [vmem:[#allocation4 + $0xd0] sm:$0xff]
        %v274 = vld [vmem:[#allocation4 + $0xd8] sm:$0xff]
        %v275 = vld [vmem:[#allocation4 + $0xe0] sm:$0xff]
        %v276 = vld [vmem:[#allocation4 + $0xe8] sm:$0xff]
        %v277 = vld [vmem:[#allocation4 + $0xf0] sm:$0xff]
        %v278 = vld [vmem:[#allocation4 + $0xf8] sm:$0xff]
        %v279 = vld [vmem:[#allocation4 + $0x100] sm:$0xff]
        %v280 = vld [vmem:[#allocation4 + $0x108] sm:$0xff]
        %v281 = vld [vmem:[#allocation4 + $0x110] sm:$0xff]
        %v282 = vld [vmem:[#allocation4 + $0x118] sm:$0xff]
        %v283 = vld [vmem:[#allocation4 + $0x120] sm:$0xff]
        %v284 = vld [vmem:[#allocation4 + $0x128] sm:$0xff]
        %v285 = vld [vmem:[#allocation4 + $0x130] sm:$0xff]
        %v286 = vld [vmem:[#allocation4 + $0x138] sm:$0xff]
        %v287 = vld [vmem:[#allocation4 + $0x140] sm:$0xff]
        %v288 = vld [vmem:[#allocation4 + $0x148] sm:$0xff]
        %v289 = vld [vmem:[#allocation4 + $0x150] sm:$0xff]
        %v290 = vld [vmem:[#allocation4 + $0x158] sm:$0xff]
        %v291 = vld [vmem:[#allocation4 + $0x160] sm:$0xff]
        %v292 = vld [vmem:[#allocation4 + $0x168] sm:$0xff]
        %v293 = vld [vmem:[#allocation4 + $0x170] sm:$0xff]
        %v294 = vld [vmem:[#allocation4 + $0x178] sm:$0xff]
        %v295 = vld [vmem:[#allocation4 + $0x180] sm:$0xff]
        %v296 = vld [vmem:[#allocation4 + $0x188] sm:$0xff]
        %v297 = vld [vmem:[#allocation4 + $0x190] sm:$0xff]
        %v298 = vld [vmem:[#allocation4 + $0x198] sm:$0xff]
        %v299 = vld [vmem:[#allocation4 + $0x1a0] sm:$0xff]
        %v300 = vld [vmem:[#allocation4 + $0x1a8] sm:$0xff]
        %v301 = vld [vmem:[#allocation4 + $0x1b0] sm:$0xff]
        %v302 = vld [vmem:[#allocation4 + $0x1b8] sm:$0xff]
        %v303 = vld [vmem:[#allocation4 + $0x1c0] sm:$0xff]
        %v304 = vld [vmem:[#allocation4 + $0x1c8] sm:$0xff]
        %v305 = vld [vmem:[#allocation4 + $0x1d0] sm:$0xff]
        %v306 = vld [vmem:[#allocation4 + $0x1d8] sm:$0xff]
        %v307 = vld [vmem:[#allocation4 + $0x1e0] sm:$0xff]
        %v308 = vld [vmem:[#allocation4 + $0x1e8] sm:$0xff]
        %v309 = vld [vmem:[#allocation4 + $0x1f0] sm:$0xff]
        %v310 = vld [vmem:[#allocation4 + $0x1f8] sm:$0xff]
        %v311 = vld [vmem:[%s235] sm:$0x1]
        %v313 = vlaneseq
        %v314 = vshrl.u32 %v313, 7
        %v315 = vsub.s32 0, %v314
        %v316 = vrot.slane %v311, %v315
        %318 = vmatprep.subr.mxu0 0.0
        %319 = vmatpush1.msra.mxu0 %v247
        %320 = vmatprep.subr.mxu0 0.0
        %321 = vmatpush1.msra.mxu0 %v248
        %322 = vmatprep.subr.mxu0 0.0
        %323 = vmatpush1.msra.mxu0 %v249
        %324 = vmatprep.subr.mxu0 0.0
        %325 = vmatpush1.msra.mxu0 %v250
        %326 = vmatprep.subr.mxu0 0.0
        %327 = vmatpush1.msra.mxu0 %v251
        %328 = vmatprep.subr.mxu0 0.0
        %329 = vmatpush1.msra.mxu0 %v252
        %330 = vmatprep.subr.mxu0 0.0
        %331 = vmatpush1.msra.mxu0 %v253
        %332 = vmatprep.subr.mxu0 0.0
        %333 = vmatpush1.msra.mxu0 %v254
        %334 = vmatprep.subr.mxu0 0.0
        %335 = vmatpush1.msra.mxu0 %v255
        %336 = vmatprep.subr.mxu0 0.0
        %337 = vmatpush1.msra.mxu0 %v256
        %338 = vmatprep.subr.mxu0 0.0
        %339 = vmatpush1.msra.mxu0 %v257
        %340 = vmatprep.subr.mxu0 0.0
        %341 = vmatpush1.msra.mxu0 %v258
        %342 = vmatprep.subr.mxu0 0.0
        %343 = vmatpush1.msra.mxu0 %v259
        %344 = vmatprep.subr.mxu0 0.0
        %345 = vmatpush1.msra.mxu0 %v260
        %346 = vmatprep.subr.mxu0 0.0
        %347 = vmatpush1.msra.mxu0 %v261
        %348 = vmatprep.subr.mxu0 0.0
        %349 = vmatpush1.msra.mxu0 %v262
        %350 = vmatprep.subr.mxu0 0.0
        %351 = vmatpush1.msra.mxu0 %v263
        %352 = vmatprep.subr.mxu0 0.0
        %353 = vmatpush1.msra.mxu0 %v264
        %354 = vmatprep.subr.mxu0 0.0
        %355 = vmatpush1.msra.mxu0 %v265
        %356 = vmatprep.subr.mxu0 0.0
        %357 = vmatpush1.msra.mxu0 %v266
        %358 = vmatprep.subr.mxu0 0.0
        %359 = vmatpush1.msra.mxu0 %v267
        %360 = vmatprep.subr.mxu0 0.0
        %361 = vmatpush1.msra.mxu0 %v268
        %362 = vmatprep.subr.mxu0 0.0
        %363 = vmatpush1.msra.mxu0 %v269
        %364 = vmatprep.subr.mxu0 0.0
        %365 = vmatpush1.msra.mxu0 %v270
        %366 = vmatprep.subr.mxu0 0.0
        %367 = vmatpush1.msra.mxu0 %v271
        %368 = vmatprep.subr.mxu0 0.0
        %369 = vmatpush1.msra.mxu0 %v272
        %370 = vmatprep.subr.mxu0 0.0
        %371 = vmatpush1.msra.mxu0 %v273
        %372 = vmatprep.subr.mxu0 0.0
        %373 = vmatpush1.msra.mxu0 %v274
        %374 = vmatprep.subr.mxu0 0.0
        %375 = vmatpush1.msra.mxu0 %v275
        %376 = vmatprep.subr.mxu0 0.0
        %377 = vmatpush1.msra.mxu0 %v276
        %378 = vmatprep.subr.mxu0 0.0
        %379 = vmatpush1.msra.mxu0 %v277
        %380 = vmatprep.subr.mxu0 0.0
        %381 = vmatpush1.msra.mxu0 %v278
        %382 = vmatprep.mubr.f32.mxu0 %v244
        %383 = vmatmul.mubr.f32.gmra.mrb[0].mxu0 %v243
        %v384 = vpop.f32.mrb[0].mxu0
        %v385 = vadd.f32 %v316, %v384
        %v386 = vpop.f32.mrb[0].mxu0
        %387 = vdwg.mxu0
        %388 = vmatprep.subr.mxu0 0.0
        %389 = vmatpush1.msra.mxu0 %v279
        %390 = vmatprep.subr.mxu0 0.0
        %391 = vmatpush1.msra.mxu0 %v280
        %392 = vmatprep.subr.mxu0 0.0
        %393 = vmatpush1.msra.mxu0 %v281
        %394 = vmatprep.subr.mxu0 0.0
        %395 = vmatpush1.msra.mxu0 %v282
        %396 = vmatprep.subr.mxu0 0.0
        %397 = vmatpush1.msra.mxu0 %v283
        %398 = vmatprep.subr.mxu0 0.0
        %399 = vmatpush1.msra.mxu0 %v284
        %400 = vmatprep.subr.mxu0 0.0
        %401 = vmatpush1.msra.mxu0 %v285
        %402 = vmatprep.subr.mxu0 0.0
        %403 = vmatpush1.msra.mxu0 %v286
        %404 = vmatprep.subr.mxu0 0.0
        %405 = vmatpush1.msra.mxu0 %v287
        %406 = vmatprep.subr.mxu0 0.0
        %407 = vmatpush1.msra.mxu0 %v288
        %408 = vmatprep.subr.mxu0 0.0
        %409 = vmatpush1.msra.mxu0 %v289
        %410 = vmatprep.subr.mxu0 0.0
        %411 = vmatpush1.msra.mxu0 %v290
        %412 = vmatprep.subr.mxu0 0.0
        %413 = vmatpush1.msra.mxu0 %v291
        %414 = vmatprep.subr.mxu0 0.0
        %415 = vmatpush1.msra.mxu0 %v292
        %416 = vmatprep.subr.mxu0 0.0
        %417 = vmatpush1.msra.mxu0 %v293
        %418 = vmatprep.subr.mxu0 0.0
        %419 = vmatpush1.msra.mxu0 %v294
        %420 = vmatprep.subr.mxu0 0.0
        %421 = vmatpush1.msra.mxu0 %v295
        %422 = vmatprep.subr.mxu0 0.0
        %423 = vmatpush1.msra.mxu0 %v296
        %424 = vmatprep.subr.mxu0 0.0
        %425 = vmatpush1.msra.mxu0 %v297
        %426 = vmatprep.subr.mxu0 0.0
        %427 = vmatpush1.msra.mxu0 %v298
        %428 = vmatprep.subr.mxu0 0.0
        %429 = vmatpush1.msra.mxu0 %v299
        %430 = vmatprep.subr.mxu0 0.0
        %431 = vmatpush1.msra.mxu0 %v300
        %432 = vmatprep.subr.mxu0 0.0
        %433 = vmatpush1.msra.mxu0 %v301
        %434 = vmatprep.subr.mxu0 0.0
        %435 = vmatpush1.msra.mxu0 %v302
        %436 = vmatprep.subr.mxu0 0.0
        %437 = vmatpush1.msra.mxu0 %v303
        %438 = vmatprep.subr.mxu0 0.0
        %439 = vmatpush1.msra.mxu0 %v304
        %440 = vmatprep.subr.mxu0 0.0
        %441 = vmatpush1.msra.mxu0 %v305
        %442 = vmatprep.subr.mxu0 0.0
        %443 = vmatpush1.msra.mxu0 %v306
        %444 = vmatprep.subr.mxu0 0.0
        %445 = vmatpush1.msra.mxu0 %v307
        %446 = vmatprep.subr.mxu0 0.0
        %447 = vmatpush1.msra.mxu0 %v308
        %448 = vmatprep.subr.mxu0 0.0
        %449 = vmatpush1.msra.mxu0 %v309
        %450 = vmatprep.subr.mxu0 0.0
        %451 = vmatpush1.msra.mxu0 %v310
        %452 = vmatprep.mubr.f32.mxu0 %v246
        %453 = vmatmul.mubr.f32.gmra.mrb[0].mxu0 %v245
        %v454 = vpop.f32.mrb[0].mxu0
        %v455 = vadd.f32 %v385, %v454
        %v456 = vpop.f32.mrb[0].mxu0
        %457 = vdwg.mxu0
        %vm458 = vcmask 64512
        %459 = vst.msk [vmem:[%s242] sm:$0xff] %vm458, %v455
        %p460 = scmp.lt.s32.totalorder %s22, 1
        %s461 = scalar_select %p460, %s22, 1
        %p462 = scmp.lt.s32.totalorder %s23, 0
        %s463 = scalar_select %p462, %s23, 0
        %s464 = sadd.s32 %s463, %s461
        %s465 = smul.addr %s464, 8
        %s466 = scalar_lea.vmem %s3, %s465
        // Predicated region
        $region41: #{tpu_custom_call.1} parent=31 // pred_check
          %p467 = pneg %p128
        $region42: #{tpu_custom_call.1} parent=31 // pred_check_branch
          %469 = sbr.rel (%p467) target = $region44
        $region43: #{tpu_custom_call.1} parent=31 // pred_region
          _
        $region44: #{tpu_custom_call.1} parent=31 // pred_fallthru
          _
      $region32: #{tpu_custom_call.1} parent=5 // pred_fallthru
        _
      %p470 = scmp.le.s32.totalorder 2, %s13
      // Predicated region
      $region45: #{tpu_custom_call.1} parent=5 // pred_check
        %p471 = pneg %p470
      $region46: #{tpu_custom_call.1} parent=5 // pred_check_branch
        %473 = sbr.rel (%p471) target = $region48
      $region47: #{tpu_custom_call.1} parent=5 // pred_region
        %s474 = ssub.s32 %s13, 2
        // Predicated region
        $region49: #{tpu_custom_call.1} parent=47 // pred_check
          %p475 = pneg %p134
        $region50: #{tpu_custom_call.1} parent=47 // pred_check_branch
          %477 = sbr.rel (%p475) target = $region52
        $region51: #{tpu_custom_call.1} parent=47 // pred_region
          %p478 = scmp.lt.s32.totalorder %s24, 1
          %s479 = scalar_select %p478, %s24, 1
          %p480 = scmp.lt.s32.totalorder %s25, 0
          %s481 = scalar_select %p480, %s25, 0
          %s482 = sadd.s32 %s481, %s479
          %s483 = smul.addr %s482, 8
          %s484 = scalar_lea.vmem %s3, %s483
        $region52: #{tpu_custom_call.1} parent=47 // pred_fallthru
          _
      $region48: #{tpu_custom_call.1} parent=5 // pred_fallthru
        _
    $region6: #{tpu_custom_call.1} parent=1 // loop_footer
      %s17 = sadd.s32 1, %s13
    $region7: #{tpu_custom_call.1} parent=1 // loop_footer_branch
      %12 = sbr.rel target = $region3
    $region8: #{tpu_custom_call.1} parent=1 // loop_exit
      _
    %485 = vsyncpa [#allocation3], 1
    %s486 = scalar_lea.sflag [#allocation3], 1
    %487 = vsyncpa %s486, 1
    %488 = vsyncpa [#allocation5], 1

</llo_original>
